<compile_context>
chip_gen: v7x
topology: tpu7x:2x2x1
jax: 0.10.0
libtpu: 0.0.40
codegen_flags: <defaults>
</compile_context>

<pallas_src>
import jax
import jax.numpy as jnp
import numpy as np
from jax.experimental import pallas as pl
from jax.experimental.pallas import tpu as pltpu


# ---------------------------------------------------------------------------
# Kernel 1: batch-invariant attention map  A = softmax(z_re·cos + z_im·sin)
# ---------------------------------------------------------------------------
def _attn_map_kernel(zre_ref, zim_ref, cos_ref, sin_ref, a_ref):
    # zre/zim: (D1, K*K)   cos/sin: (K*K, C)   a: (D1, C), f32
    logits = jnp.dot(zre_ref[...], cos_ref[...], preferred_element_type=jnp.float32)
    logits = logits + jnp.dot(
        zim_ref[...], sin_ref[...], preferred_element_type=jnp.float32
    )
    m = jnp.max(logits, axis=-1, keepdims=True)
    e = jnp.exp(logits - m)
    a_ref[...] = e * pl.reciprocal(
        jnp.sum(e, axis=-1, keepdims=True), approx=False
    )


# ---------------------------------------------------------------------------
# Kernel 2: batched projection  out[b, :, tile] = A @ X[b, :, tile]
# ---------------------------------------------------------------------------
def _project_kernel(a_ref, x_ref, o_ref):
    # a_ref: (D1, C)   x_ref: (C, TILE_T)   o_ref: (D1, TILE_T)
    o_ref[...] = jnp.dot(
        a_ref[...], x_ref[...], preferred_element_type=jnp.float32
    ).astype(o_ref.dtype)


def _choose_tile_t(T: int, itemsize: int, C: int, D1: int) -> int:
    """Largest lane-dense T tile that fits a conservative VMEM budget."""
    if T <= 512:
        return T  # full-extent block: always legal, even if not 128-aligned
    budget = 16 * 1024 * 1024  # conservative vs v5e default / v7x 64 MiB VMEM
    for cand in (2048, 1024, 512, 256, 128):
        need = 2 * (C + D1) * cand * itemsize + 2 * D1 * C * 4  # dbl-buffered
        if need <= budget:
            return cand
    return 128


def spatial_attention(z_re, z_im, cos_b, sin_b, X):
    """z_re/z_im: (D1, K, K); cos_b/sin_b: (K, K, C); X: (B, C, T) -> (B, D1, T)."""
    D1, K, _ = z_re.shape
    C = cos_b.shape[-1]
    B, Cx, T = X.shape
    assert Cx == C
    KK = K * K

    zre_f = z_re.reshape(D1, KK).astype(jnp.float32)
    zim_f = z_im.reshape(D1, KK).astype(jnp.float32)
    cos_f = cos_b.reshape(KK, C).astype(jnp.float32)
    sin_f = sin_b.reshape(KK, C).astype(jnp.float32)

    # --- Step 1: attention map (single tiny grid step, f32 softmax path) ----
    a = pl.pallas_call(
        _attn_map_kernel,
        out_shape=jax.ShapeDtypeStruct((D1, C), jnp.float32),
        grid=(1,),
        in_specs=[
            pl.BlockSpec((D1, KK), lambda i: (0, 0)),
            pl.BlockSpec((D1, KK), lambda i: (0, 0)),
            pl.BlockSpec((KK, C), lambda i: (0, 0)),
            pl.BlockSpec((KK, C), lambda i: (0, 0)),
        ],
        out_specs=pl.BlockSpec((D1, C), lambda i: (0, 0)),
        compiler_params=pltpu.CompilerParams(
            dimension_semantics=("arbitrary",),
        ),
    )(zre_f, zim_f, cos_f, sin_f)

    # Cast A to the activation dtype: bf16 X => bf16 MXU + halved HBM bytes.
    a = a.astype(X.dtype)

    # --- Step 2: batched matmul over a fully parallel (B, T-tile) grid ------
    itemsize = jnp.dtype(X.dtype).itemsize
    tile_t = _choose_tile_t(T, itemsize, C, D1)
    num_t = pl.cdiv(T, tile_t)

    # Explicit VMEM limit: double-buffered X/out tiles + A, with headroom,
    # capped at v7x's 64 MiB physical VMEM.
    vmem_need = 2 * (C + D1) * tile_t * itemsize + 2 * D1 * C * itemsize
    vmem_limit = int(min(max(4 * vmem_need, 8 << 20), 64 << 20))

    # TODO(synk): if D1 / C are not (8,128)-aligned in production, pad them in
    # this wrapper and slice the output to keep vld/vst unmasked.
    return pl.pallas_call(
        _project_kernel,
        out_shape=jax.ShapeDtypeStruct((B, D1, T), X.dtype),
        grid=(B, num_t),
        in_specs=[
            pl.BlockSpec((D1, C), lambda b, t: (0, 0)),
            pl.BlockSpec((pl.Squeezed(), C, tile_t), lambda b, t: (b, 0, t)),
        ],
        out_specs=pl.BlockSpec((pl.Squeezed(), D1, tile_t), lambda b, t: (b, 0, t)),
        compiler_params=pltpu.CompilerParams(
            dimension_semantics=("parallel", "parallel"),
            vmem_limit_bytes=vmem_limit,
        ),
    )(a, X)


def reference(z_re, z_im, cos_b, sin_b, X):
    real = jnp.einsum("dkl,klc->dc", z_re, cos_b)
    imag = jnp.einsum("dkl,klc->dc", z_im, sin_b)
    a = jax.nn.softmax(real + imag, axis=-1)
    return jnp.einsum("oi,bit->bot", a, X)


if __name__ == "__main__":
    # Small shapes consistent with the module's forward.
    B, C, T = 2, 4, 16  # X: (b, c, t)
    D1, K = 8, 4

    key = jax.random.PRNGKey(0)
    k_loc, k_re, k_im, k_x = jax.random.split(key, 4)

    # Sensor locations (loc has shape (C, 2); columns are x, y in [0, 1)).
    loc = jax.random.uniform(k_loc, (C, 2), dtype=jnp.float32)
    x_loc, y_loc = loc[:, 0], loc[:, 1]

    # kaiming_uniform_(a=sqrt(5)) on a (D1, K, K) tensor: fan_in = K*K,
    # gain = sqrt(2/(1+5)) = sqrt(1/3), bound = gain*sqrt(3/fan_in) = 1/K.
    bound = 1.0 / K
    z_re = jax.random.uniform(k_re, (D1, K, K), jnp.float32, -bound, bound)
    z_im = jax.random.uniform(k_im, (D1, K, K), jnp.float32, -bound, bound)

    # Fourier buffers (plain-JAX glue, matches the PyTorch __init__).
    k_arange = jnp.arange(K, dtype=jnp.float32)
    rad1 = jnp.einsum("k,c->kc", k_arange, x_loc)  # (K, C)
    rad2 = jnp.einsum("l,c->lc", k_arange, y_loc)  # (K, C)
    rad = rad1[:, None, :] + rad2[None, :, :]      # (K, K, C)
    cos_b = jnp.cos(2 * jnp.pi * rad)
    sin_b = jnp.sin(2 * jnp.pi * rad)

    X = jax.random.normal(k_x, (B, C, T), dtype=jnp.float32)

    out = spatial_attention(z_re, z_im, cos_b, sin_b, X)
    out = jax.block_until_ready(out)

    ref = jax.block_until_ready(reference(z_re, z_im, cos_b, sin_b, X))
    assert out.shape == (B, D1, T)
    np.testing.assert_allclose(np.asarray(out), np.asarray(ref), rtol=1e-5, atol=1e-5)

    print("KERNEL_OK")
</pallas_src>

<mosaic_0001>
module attributes {stable_mosaic.version = 11 : i64} {
  func.func @_attn_map_kernel(%arg0: i32, %arg1: memref<8x16xf32, #tpu.memory_space<vmem>>, %arg2: memref<8x16xf32, #tpu.memory_space<vmem>>, %arg3: memref<16x4xf32, #tpu.memory_space<vmem>>, %arg4: memref<16x4xf32, #tpu.memory_space<vmem>>, %arg5: memref<8x4xf32, #tpu.memory_space<vmem>>) attributes {dimension_semantics = [#tpu.dimension_semantics<arbitrary>], iteration_bounds = array<i64: 1>, scalar_prefetch = 0 : i64, scratch_operands = 0 : i64, tpu.core_type = #tpu.core_type<tc>, window_params = [{pipeline_mode = #tpu.pipeline_mode<synchronous>, transform_indices = @transform_0, window_bounds = array<i64: 8, 16>}, {pipeline_mode = #tpu.pipeline_mode<synchronous>, transform_indices = @transform_1, window_bounds = array<i64: 8, 16>}, {pipeline_mode = #tpu.pipeline_mode<synchronous>, transform_indices = @transform_2, window_bounds = array<i64: 16, 4>}, {pipeline_mode = #tpu.pipeline_mode<synchronous>, transform_indices = @transform_3, window_bounds = array<i64: 16, 4>}, {pipeline_mode = #tpu.pipeline_mode<synchronous>, transform_indices = @transform_4, window_bounds = array<i64: 8, 4>}]} {
    %c0 = arith.constant 0 : index
    %c0_0 = arith.constant 0 : index
    %0 = vector.load %arg1[%c0, %c0_0] : memref<8x16xf32, #tpu.memory_space<vmem>>, vector<8x16xf32>
    %c0_1 = arith.constant 0 : index
    %c0_2 = arith.constant 0 : index
    %1 = vector.load %arg3[%c0_1, %c0_2] : memref<16x4xf32, #tpu.memory_space<vmem>>, vector<16x4xf32>
    %cst = arith.constant dense<0.000000e+00> : vector<8x4xf32>
    %2 = tpu.matmul %0, %1, %cst {dimension_numbers = #tpu.dot_dimension_numbers<[1], [0], [0], [1], [0, 0, 1, 1], [], []>} : vector<8x16xf32>, vector<16x4xf32>, vector<8x4xf32> -> vector<8x4xf32>
    %c0_3 = arith.constant 0 : index
    %c0_4 = arith.constant 0 : index
    %3 = vector.load %arg2[%c0_3, %c0_4] : memref<8x16xf32, #tpu.memory_space<vmem>>, vector<8x16xf32>
    %c0_5 = arith.constant 0 : index
    %c0_6 = arith.constant 0 : index
    %4 = vector.load %arg4[%c0_5, %c0_6] : memref<16x4xf32, #tpu.memory_space<vmem>>, vector<16x4xf32>
    %cst_7 = arith.constant dense<0.000000e+00> : vector<8x4xf32>
    %5 = tpu.matmul %3, %4, %cst_7 {dimension_numbers = #tpu.dot_dimension_numbers<[1], [0], [0], [1], [0, 0, 1, 1], [], []>} : vector<8x16xf32>, vector<16x4xf32>, vector<8x4xf32> -> vector<8x4xf32>
    %6 = arith.addf %2, %5 : vector<8x4xf32>
    %cst_8 = arith.constant dense<0xFF800000> : vector<8xf32>
    %7 = vector.multi_reduction <maximumf>, %6, %cst_8 [1] : vector<8x4xf32> to vector<8xf32>
    %8 = vector.shape_cast %7 : vector<8xf32> to vector<8x1xf32>
    %9 = vector.broadcast %8 : vector<8x1xf32> to vector<8x4xf32>
    %10 = arith.subf %6, %9 : vector<8x4xf32>
    %11 = math.exp %10 : vector<8x4xf32>
    %cst_9 = arith.constant dense<0.000000e+00> : vector<8xf32>
    %12 = vector.multi_reduction <add>, %11, %cst_9 [1] : vector<8x4xf32> to vector<8xf32>
    %13 = vector.shape_cast %12 : vector<8xf32> to vector<8x1xf32>
    %14 = tpu.reciprocal %13 : vector<8x1xf32> -> vector<8x1xf32>
    %15 = vector.broadcast %14 : vector<8x1xf32> to vector<8x4xf32>
    %16 = arith.mulf %11, %15 : vector<8x4xf32>
    %c0_10 = arith.constant 0 : index
    %c0_11 = arith.constant 0 : index
    %17 = vector.load %arg5[%c0_10, %c0_11] : memref<8x4xf32, #tpu.memory_space<vmem>>, vector<8x4xf32>
    tpu.vector_store %arg5[%c0_10, %c0_11], %16 {strides = array<i32>} : memref<8x4xf32, #tpu.memory_space<vmem>>, vector<8x4xf32>,
    return
  }
  func.func @transform_0(%arg0: i32) -> (i32, i32) {
    %c0_i32 = arith.constant 0 : i32
    %c0_i32_0 = arith.constant 0 : i32
    %c0_i32_1 = arith.constant 0 : i32
    return %c0_i32, %c0_i32_0 : i32, i32
  }
  func.func @transform_1(%arg0: i32) -> (i32, i32) {
    %c0_i32 = arith.constant 0 : i32
    %c0_i32_0 = arith.constant 0 : i32
    %c0_i32_1 = arith.constant 0 : i32
    return %c0_i32, %c0_i32_0 : i32, i32
  }
  func.func @transform_2(%arg0: i32) -> (i32, i32) {
    %c0_i32 = arith.constant 0 : i32
    %c0_i32_0 = arith.constant 0 : i32
    %c0_i32_1 = arith.constant 0 : i32
    return %c0_i32, %c0_i32_0 : i32, i32
  }
  func.func @transform_3(%arg0: i32) -> (i32, i32) {
    %c0_i32 = arith.constant 0 : i32
    %c0_i32_0 = arith.constant 0 : i32
    %c0_i32_1 = arith.constant 0 : i32
    return %c0_i32, %c0_i32_0 : i32, i32
  }
  func.func @transform_4(%arg0: i32) -> (i32, i32) {
    %c0_i32 = arith.constant 0 : i32
    %c0_i32_0 = arith.constant 0 : i32
    %c0_i32_1 = arith.constant 0 : i32
    return %c0_i32, %c0_i32_0 : i32, i32
  }
}

</mosaic_0001>

<llo_original>
// kernel: tpu_custom_call.1
$region0: #{tpu_custom_call.1}
  #allocation0 [shape = 'u32[]', space=smem, size = 0x4, offset = 0x4, fixed_abs, tag = 'smem constant byte address 0x4 - core index']
  #allocation1 [shape = 'u32[144,128]{1,0:T(1,128)}', space=vmem, size = 0x12000, scoped, tag = 'internal scratch']
  %s0 = inlined_call_operand.vmem [shape: f32[8,16], index: 0, kind: input, shape index: {}]
  %s1 = inlined_call_operand.vmem [shape: f32[8,16], index: 1, kind: input, shape index: {}]
  %s2 = inlined_call_operand.vmem [shape: f32[16,4], index: 2, kind: input, shape index: {}]
  %s3 = inlined_call_operand.vmem [shape: f32[16,4], index: 3, kind: input, shape index: {}]
  %s4 = inlined_call_operand.vmem [shape: f32[8,4], index: 4, kind: output, shape index: {}]
  %s5 = sld [smem:[#allocation0]]
  $region26: #{tpu_custom_call.1} parent=0
    _
  %s7 = ssub.s32 1, %s5
  %s8 = scalar_select 0, %s7, %s5
  // Predicated region
  $region2: #{tpu_custom_call.1} parent=0 // pred_check
    _
  $region3: #{tpu_custom_call.1} parent=0 // pred_check_branch
    %10 = sbr.rel (0) target = $region5
  $region4: #{tpu_custom_call.1} parent=0 // pred_region
    _
  $region5: #{tpu_custom_call.1} parent=0 // pred_fallthru
    _
  // Predicated region
  $region6: #{tpu_custom_call.1} parent=0 // pred_check
    _
  $region7: #{tpu_custom_call.1} parent=0 // pred_check_branch
    %12 = sbr.rel (0) target = $region9
  $region8: #{tpu_custom_call.1} parent=0 // pred_region
    _
  $region9: #{tpu_custom_call.1} parent=0 // pred_fallthru
    _
  // Predicated region
  $region10: #{tpu_custom_call.1} parent=0 // pred_check
    _
  $region11: #{tpu_custom_call.1} parent=0 // pred_check_branch
    %14 = sbr.rel (0) target = $region13
  $region12: #{tpu_custom_call.1} parent=0 // pred_region
    _
  $region13: #{tpu_custom_call.1} parent=0 // pred_fallthru
    _
  // Predicated region
  $region14: #{tpu_custom_call.1} parent=0 // pred_check
    _
  $region15: #{tpu_custom_call.1} parent=0 // pred_check_branch
    %16 = sbr.rel (0) target = $region17
  $region16: #{tpu_custom_call.1} parent=0 // pred_region
    _
  $region17: #{tpu_custom_call.1} parent=0 // pred_fallthru
    _
  %v17 = vld [vmem:[%s0] sm:$0xff]
  %v18 = vld [vmem:[%s2] sm:$0xff]
  %v19 = vld [vmem:[%s2 + $0x8] sm:$0xff]
  %v20 = vld [vmem:[%s1] sm:$0xff]
  %v21 = vld [vmem:[%s3] sm:$0xff]
  %v22 = vld [vmem:[%s3 + $0x8] sm:$0xff]
  %vm23 = vcmask 130048
  %v25 = vsel %vm23, %v20, 0
  %27 = vmatprep.subr.mxu0 0.0
  %28 = vmatpush1.msra.mxu0 %v21
  %29 = vmatprep.subr.mxu0 0.0
  %30 = vmatpush1.msra.mxu0 %v22
  %31 = vmatprep.subr.mxu0 0.0
  %32 = vmatpush1.msra.mxu0 0.0
  %33 = vmatprep.subr.mxu0 0.0
  %34 = vmatpush1.msra.mxu0 0.0
  %35 = vmatprep.subr.mxu0 0.0
  %36 = vmatpush1.msra.mxu0 0.0
  %37 = vmatprep.subr.mxu0 0.0
  %38 = vmatpush1.msra.mxu0 0.0
  %39 = vmatprep.subr.mxu0 0.0
  %40 = vmatpush1.msra.mxu0 0.0
  %41 = vmatprep.subr.mxu0 0.0
  %42 = vmatpush1.msra.mxu0 0.0
  %43 = vmatprep.subr.mxu0 0.0
  %44 = vmatpush1.msra.mxu0 0.0
  %45 = vmatprep.subr.mxu0 0.0
  %46 = vmatpush1.msra.mxu0 0.0
  %47 = vmatprep.subr.mxu0 0.0
  %48 = vmatpush1.msra.mxu0 0.0
  %49 = vmatprep.subr.mxu0 0.0
  %50 = vmatpush1.msra.mxu0 0.0
  %51 = vmatprep.subr.mxu0 0.0
  %52 = vmatpush1.msra.mxu0 0.0
  %53 = vmatprep.subr.mxu0 0.0
  %54 = vmatpush1.msra.mxu0 0.0
  %55 = vmatprep.subr.mxu0 0.0
  %56 = vmatpush1.msra.mxu0 0.0
  %57 = vmatprep.subr.mxu0 0.0
  %58 = vmatpush1.msra.mxu0 0.0
  %59 = vmatprep.subr.mxu0 0.0
  %60 = vmatpush1.msra.mxu0 0.0
  %61 = vmatprep.subr.mxu0 0.0
  %62 = vmatpush1.msra.mxu0 0.0
  %63 = vmatprep.subr.mxu0 0.0
  %64 = vmatpush1.msra.mxu0 0.0
  %65 = vmatprep.subr.mxu0 0.0
  %66 = vmatpush1.msra.mxu0 0.0
  %67 = vmatprep.subr.mxu0 0.0
  %68 = vmatpush1.msra.mxu0 0.0
  %69 = vmatprep.subr.mxu0 0.0
  %70 = vmatpush1.msra.mxu0 0.0
  %71 = vmatprep.subr.mxu0 0.0
  %72 = vmatpush1.msra.mxu0 0.0
  %73 = vmatprep.subr.mxu0 0.0
  %74 = vmatpush1.msra.mxu0 0.0
  %75 = vmatprep.subr.mxu0 0.0
  %76 = vmatpush1.msra.mxu0 0.0
  %77 = vmatprep.subr.mxu0 0.0
  %78 = vmatpush1.msra.mxu0 0.0
  %79 = vmatprep.subr.mxu0 0.0
  %80 = vmatpush1.msra.mxu0 0.0
  %81 = vmatprep.subr.mxu0 0.0
  %82 = vmatpush1.msra.mxu0 0.0
  %83 = vmatprep.subr.mxu0 0.0
  %84 = vmatpush1.msra.mxu0 0.0
  %85 = vmatprep.subr.mxu0 0.0
  %86 = vmatpush1.msra.mxu0 0.0
  %87 = vmatprep.subr.mxu0 0.0
  %88 = vmatpush1.msra.mxu0 0.0
  %89 = vmatprep.subr.mxu0 0.0
  %90 = vmatpush1.msra.mxu0 0.0
  %91 = vmatprep.mubr.f32.mxu0 0.0
  %92 = vmatmul.mubr.f32.gmra.mrb[0].mxu0 %v25
  %v93 = vpop.f32.mrb[0].mxu0
  %v94 = vadd.f32 0.0, %v93
  %v95 = vpop.f32.mrb[0].mxu0
  %96 = vdwg.mxu0
  %v98 = vsel %vm23, %v17, 0
  %100 = vmatprep.subr.mxu0 0.0
  %101 = vmatpush1.msra.mxu0 %v18
  %102 = vmatprep.subr.mxu0 0.0
  %103 = vmatpush1.msra.mxu0 %v19
  %104 = vmatprep.subr.mxu0 0.0
  %105 = vmatpush1.msra.mxu0 0.0
  %106 = vmatprep.subr.mxu0 0.0
  %107 = vmatpush1.msra.mxu0 0.0
  %108 = vmatprep.subr.mxu0 0.0
  %109 = vmatpush1.msra.mxu0 0.0
  %110 = vmatprep.subr.mxu0 0.0
  %111 = vmatpush1.msra.mxu0 0.0
  %112 = vmatprep.subr.mxu0 0.0
  %113 = vmatpush1.msra.mxu0 0.0
  %114 = vmatprep.subr.mxu0 0.0
  %115 = vmatpush1.msra.mxu0 0.0
  %116 = vmatprep.subr.mxu0 0.0
  %117 = vmatpush1.msra.mxu0 0.0
  %118 = vmatprep.subr.mxu0 0.0
  %119 = vmatpush1.msra.mxu0 0.0
  %120 = vmatprep.subr.mxu0 0.0
  %121 = vmatpush1.msra.mxu0 0.0
  %122 = vmatprep.subr.mxu0 0.0
  %123 = vmatpush1.msra.mxu0 0.0
  %124 = vmatprep.subr.mxu0 0.0
  %125 = vmatpush1.msra.mxu0 0.0
  %126 = vmatprep.subr.mxu0 0.0
  %127 = vmatpush1.msra.mxu0 0.0
  %128 = vmatprep.subr.mxu0 0.0
  %129 = vmatpush1.msra.mxu0 0.0
  %130 = vmatprep.subr.mxu0 0.0
  %131 = vmatpush1.msra.mxu0 0.0
  %132 = vmatprep.subr.mxu0 0.0
  %133 = vmatpush1.msra.mxu0 0.0
  %134 = vmatprep.subr.mxu0 0.0
  %135 = vmatpush1.msra.mxu0 0.0
  %136 = vmatprep.subr.mxu0 0.0
  %137 = vmatpush1.msra.mxu0 0.0
  %138 = vmatprep.subr.mxu0 0.0
  %139 = vmatpush1.msra.mxu0 0.0
  %140 = vmatprep.subr.mxu0 0.0
  %141 = vmatpush1.msra.mxu0 0.0
  %142 = vmatprep.subr.mxu0 0.0
  %143 = vmatpush1.msra.mxu0 0.0
  %144 = vmatprep.subr.mxu0 0.0
  %145 = vmatpush1.msra.mxu0 0.0
  %146 = vmatprep.subr.mxu0 0.0
  %147 = vmatpush1.msra.mxu0 0.0
  %148 = vmatprep.subr.mxu0 0.0
  %149 = vmatpush1.msra.mxu0 0.0
  %150 = vmatprep.subr.mxu0 0.0
  %151 = vmatpush1.msra.mxu0 0.0
  %152 = vmatprep.subr.mxu0 0.0
  %153 = vmatpush1.msra.mxu0 0.0
  %154 = vmatprep.subr.mxu0 0.0
  %155 = vmatpush1.msra.mxu0 0.0
  %156 = vmatprep.subr.mxu0 0.0
  %157 = vmatpush1.msra.mxu0 0.0
  %158 = vmatprep.subr.mxu0 0.0
  %159 = vmatpush1.msra.mxu0 0.0
  %160 = vmatprep.subr.mxu0 0.0
  %161 = vmatpush1.msra.mxu0 0.0
  %162 = vmatprep.subr.mxu0 0.0
  %163 = vmatpush1.msra.mxu0 0.0
  %164 = vmatprep.mubr.f32.mxu0 0.0
  %165 = vmatmul.mubr.f32.gmra.mrb[0].mxu0 %v98
  %v166 = vpop.f32.mrb[0].mxu0
  %v167 = vadd.f32 %v94, %v166
  %v168 = vpop.f32.mrb[0].mxu0
  %169 = vdwg.mxu0
  %vm170 = vcmask 31744
  %v171 = vsel %vm170, %v167, -inf
  %172 = vmax.xlane.f32.xlu0 %v171
  %v173 = vpop.xlane.xlu0 %172
  %v174 = vsub.f32 %v167, %v173
  %v175 = vmul.f32 %v174, 1.442695
  %v176 = vpow.pop %v175
  %v177 = vsel %vm170, %v176, 0.0
  %178 = vadd.xlane.f32.xlu0 %v177
  %v179 = vpop.xlane.xlu0 %178
  %v180 = vrcp.pop %v179
  %v181 = vmul.f32 %v176, %v180
  %182 = vst.msk [vmem:[%s4] sm:$0xff] %vm170, %v181
  // Predicated region
  $region18: #{tpu_custom_call.1} parent=0 // pred_check
    _
  $region19: #{tpu_custom_call.1} parent=0 // pred_check_branch
    %184 = sbr.rel (0) target = $region21
  $region20: #{tpu_custom_call.1} parent=0 // pred_region
    _
  $region21: #{tpu_custom_call.1} parent=0 // pred_fallthru
    _
  // Predicated region
  $region22: #{tpu_custom_call.1} parent=0 // pred_check
    _
  $region23: #{tpu_custom_call.1} parent=0 // pred_check_branch
    %186 = sbr.rel (0) target = $region25
  $region24: #{tpu_custom_call.1} parent=0 // pred_region
    _
  $region25: #{tpu_custom_call.1} parent=0 // pred_fallthru
    _

</llo_original>
